<compile_context>
chip_gen: v7x
topology: tpu7x:2x2x1
jax: 0.10.0
libtpu: 0.0.40
codegen_flags: <defaults>
</compile_context>

<pallas_src>
import jax
import jax.numpy as jnp
from jax.experimental import pallas as pl
from jax.experimental.pallas import tpu as pltpu


def _sigmoid_mul_kernel(gate_ref, x_ref, o_ref):
    # gate_ref: (TILE_R, 1)   x_ref: (TILE_R, HW)   o_ref: (TILE_R, HW)
    g = jax.nn.sigmoid(gate_ref[...].astype(jnp.float32))      # EUP exp + VPU
    x = x_ref[...].astype(jnp.float32)
    o_ref[...] = (g * x).astype(o_ref.dtype)                   # lane broadcast


def sigmoid_mul(x371, x367, *, tile_r=256):
    """sigmoid(x371) * x367 with x371: (N,C,1,1), x367: (N,C,H,W)."""
    n, c, h, w = x367.shape
    assert x371.shape == (n, c, 1, 1)
    nc, hw = n * c, h * w

    x_2d = x367.reshape(nc, hw)
    g_2d = x371.reshape(nc, 1)

    # Sublane packing: 8 rows for 32-bit dtypes, 16 for bf16.
    sub = 16 if x367.dtype == jnp.bfloat16 else 8
    tile_r = max(sub, (tile_r // sub) * sub)
    if tile_r >= nc:
        # Single block covering the full row extent (full-dim block is always
        # a legal block shape, even if nc isn't a multiple of the sublane).
        tile_r = nc
    grid = (pl.cdiv(nc, tile_r),)

    out_2d = pl.pallas_call(
        _sigmoid_mul_kernel,
        out_shape=jax.ShapeDtypeStruct((nc, hw), x367.dtype),
        grid_spec=pltpu.PrefetchScalarGridSpec(
            num_scalar_prefetch=0,
            grid=grid,
            in_specs=[
                pl.BlockSpec((tile_r, 1), lambda i: (i, 0)),   # per-row gate
                pl.BlockSpec((tile_r, hw), lambda i: (i, 0)),  # activations
            ],
            out_specs=pl.BlockSpec((tile_r, hw), lambda i: (i, 0)),
        ),
        compiler_params=pltpu.CompilerParams(
            # Row tiles are independent -> parallel (megacore sharding on v7x).
            dimension_semantics=("parallel",),
        ),
    )(g_2d, x_2d)

    return out_2d.reshape(n, c, h, w)


if __name__ == "__main__":
    key = jax.random.PRNGKey(0)
    k1, k2 = jax.random.split(key)

    # Shapes match the PyTorch module: x367 (N,C,H,W), x371 (N,C,1,1)
    x367 = jax.random.normal(k1, (1, 336, 14, 14), dtype=jnp.float32)
    x371 = jax.random.normal(k2, (1, 336, 1, 1), dtype=jnp.float32)

    out = sigmoid_mul(x371, x367)
    out = jax.block_until_ready(out)

    # Reference check in plain JAX
    ref = jax.nn.sigmoid(x371) * x367
    assert out.shape == (1, 336, 14, 14)
    assert jnp.allclose(out, ref, atol=1e-6, rtol=1e-6)

    print("KERNEL_OK")
</pallas_src>

<mosaic_0001>
module attributes {stable_mosaic.version = 11 : i64} {
  func.func @_sigmoid_mul_kernel(%arg0: i32, %arg1: memref<256x1xf32, #tpu.memory_space<vmem>>, %arg2: memref<256x196xf32, #tpu.memory_space<vmem>>, %arg3: memref<256x196xf32, #tpu.memory_space<vmem>>) attributes {dimension_semantics = [#tpu.dimension_semantics<parallel>], iteration_bounds = array<i64: 2>, scalar_prefetch = 0 : i64, scratch_operands = 0 : i64, tpu.core_type = #tpu.core_type<tc>, window_params = [{transform_indices = @transform_0, window_bounds = array<i64: 256, 1>}, {transform_indices = @transform_1, window_bounds = array<i64: 256, 196>}, {transform_indices = @transform_2, window_bounds = array<i64: 256, 196>}]} {
    %c0 = arith.constant 0 : index
    %c0_0 = arith.constant 0 : index
    %0 = vector.load %arg1[%c0, %c0_0] : memref<256x1xf32, #tpu.memory_space<vmem>>, vector<256x1xf32>
    %1 = arith.negf %0 : vector<256x1xf32>
    %2 = math.exp %1 : vector<256x1xf32>
    %cst = arith.constant 1.000000e+00 : f32
    %3 = vector.broadcast %cst : f32 to vector<256x1xf32>
    %4 = arith.addf %3, %2 : vector<256x1xf32>
    %5 = arith.divf %3, %4 : vector<256x1xf32>
    %c0_1 = arith.constant 0 : index
    %c0_2 = arith.constant 0 : index
    %6 = vector.load %arg2[%c0_1, %c0_2] : memref<256x196xf32, #tpu.memory_space<vmem>>, vector<256x196xf32>
    %7 = vector.broadcast %5 : vector<256x1xf32> to vector<256x196xf32>
    %8 = arith.mulf %7, %6 : vector<256x196xf32>
    %c0_3 = arith.constant 0 : index
    %c0_4 = arith.constant 0 : index
    %9 = vector.load %arg3[%c0_3, %c0_4] : memref<256x196xf32, #tpu.memory_space<vmem>>, vector<256x196xf32>
    tpu.vector_store %arg3[%c0_3, %c0_4], %8 {strides = array<i32>} : memref<256x196xf32, #tpu.memory_space<vmem>>, vector<256x196xf32>,
    return
  }
  func.func @transform_0(%arg0: i32) -> (i32, i32) {
    %c0_i32 = arith.constant 0 : i32
    %c0_i32_0 = arith.constant 0 : i32
    return %arg0, %c0_i32 : i32, i32
  }
  func.func @transform_1(%arg0: i32) -> (i32, i32) {
    %c0_i32 = arith.constant 0 : i32
    %c0_i32_0 = arith.constant 0 : i32
    return %arg0, %c0_i32 : i32, i32
  }
  func.func @transform_2(%arg0: i32) -> (i32, i32) {
    %c0_i32 = arith.constant 0 : i32
    %c0_i32_0 = arith.constant 0 : i32
    return %arg0, %c0_i32 : i32, i32
  }
}

</mosaic_0001>

<llo_original>
// kernel: tpu_custom_call.1
$region0: #{tpu_custom_call.1}
  #allocation0 [shape = 'u32[]', space=smem, size = 0x4, offset = 0x4, fixed_abs, tag = 'smem constant byte address 0x4 - core index']
  #allocation1 [shape = 'u32[144,128]{1,0:T(1,128)}', space=vmem, size = 0x12000, scoped, tag = 'internal scratch']
  %s0 = inlined_call_operand.vmem [shape: f32[336,1], index: 0, kind: input, shape index: {}]
  %s1 = inlined_call_operand.vmem [shape: f32[336,196], index: 1, kind: input, shape index: {}]
  %s2 = inlined_call_operand.vmem [shape: f32[336,196], index: 2, kind: output, shape index: {}]
  %s3 = sld [smem:[#allocation0]]
  $region67: #{tpu_custom_call.1} parent=0
    _
  %s5 = ssub.s32 1, %s3
  %s6 = scalar_select 0, %s5, %s3
  $region1: #{tpu_custom_call.1} parent=0
    #allocation2 [shape = 'u8[524288]{0}', space=vmem, size = 0x80000, scoped, tag = 'output window, operand 0']
    loop: start=0, step=1, limit=4
    $region2: #{tpu_custom_call.1} parent=1 // loop_pre_header
      _
    $region3: #{tpu_custom_call.1} parent=1 // loop_header
      %s8 = sphi 0, %s12
      %p9 = scmp.ge.s32.totalorder %s8, 4
      %s18 = sphi 0, %s20
      %s21 = sphi 0, %s18
      %s22 = sphi 0, %s21
      %s38 = sphi 0, %s22
      %s44 = sphi 0, %s46
      %s47 = sphi 0, %s44
      %s48 = sphi 0, %s47
      %s64 = sphi 0, %s48
      %s70 = sphi 0, %s72
      %s73 = sphi 0, %s70
      %s74 = sphi 0, %s73
      %s90 = sphi 0, %s74
    $region4: #{tpu_custom_call.1} parent=1 // loop_header_branch
      %11 = sbr.rel (%p9) target = $region8
    $region5: #{tpu_custom_call.1} parent=1 // loop_body
      %s13 = ssub.s32 %s8, 1
      %s14 = ssub.s32 %s8, 2
      %s15 = sadd.s32 %s8, 1
      %s16 = ssub.s32 %s8, %s15
      %p17 = scmp.eq.s32.totalorder %s16, 0
      %s19 = sadd.s32 %s18, 1
      %s20 = scalar_select %p17, %s18, %s19
      %p23 = pneg %p17
      %p24 = scmp.eq.s32.totalorder %s8, 1
      %p25 = por %p23, %p24
      %p26 = scmp.ne.s32.totalorder %s18, %s21
      %p27 = scmp.eq.s32.totalorder %s8, 0
      %p28 = por %p26, %p27
      %p29 = scmp.ne.s32.totalorder %s18, %s21
      %p30 = scmp.eq.s32.totalorder %s13, 1
      %p31 = por %p29, %p30
      %p32 = scmp.ne.s32.totalorder %s21, %s22
      %p33 = scmp.eq.s32.totalorder %s13, 0
      %p34 = por %p32, %p33
      %p35 = scmp.ne.s32.totalorder %s21, %s22
      %p36 = scmp.eq.s32.totalorder %s14, 1
      %p37 = por %p35, %p36
      %p39 = scmp.ne.s32.totalorder %s22, %s38
      %p40 = scmp.eq.s32.totalorder %s14, 0
      %p41 = por %p39, %p40
      %s42 = ssub.s32 %s8, %s15
      %p43 = scmp.eq.s32.totalorder %s42, 0
      %s45 = sadd.s32 %s44, 1
      %s46 = scalar_select %p43, %s44, %s45
      %p49 = pneg %p43
      %p50 = scmp.eq.s32.totalorder %s8, 1
      %p51 = por %p49, %p50
      %p52 = scmp.ne.s32.totalorder %s44, %s47
      %p53 = scmp.eq.s32.totalorder %s8, 0
      %p54 = por %p52, %p53
      %p55 = scmp.ne.s32.totalorder %s44, %s47
      %p56 = scmp.eq.s32.totalorder %s13, 1
      %p57 = por %p55, %p56
      %p58 = scmp.ne.s32.totalorder %s47, %s48
      %p59 = scmp.eq.s32.totalorder %s13, 0
      %p60 = por %p58, %p59
      %p61 = scmp.ne.s32.totalorder %s47, %s48
      %p62 = scmp.eq.s32.totalorder %s14, 1
      %p63 = por %p61, %p62
      %p65 = scmp.ne.s32.totalorder %s48, %s64
      %p66 = scmp.eq.s32.totalorder %s14, 0
      %p67 = por %p65, %p66
      %s68 = ssub.s32 %s8, %s15
      %p69 = scmp.eq.s32.totalorder %s68, 0
      %s71 = sadd.s32 %s70, 1
      %s72 = scalar_select %p69, %s70, %s71
      %p75 = pneg %p69
      %p76 = scmp.eq.s32.totalorder %s8, 1
      %p77 = por %p75, %p76
      %p78 = scmp.ne.s32.totalorder %s70, %s73
      %p79 = scmp.eq.s32.totalorder %s8, 0
      %p80 = por %p78, %p79
      %p81 = scmp.ne.s32.totalorder %s70, %s73
      %p82 = scmp.eq.s32.totalorder %s13, 1
      %p83 = por %p81, %p82
      %p84 = scmp.ne.s32.totalorder %s73, %s74
      %p85 = scmp.eq.s32.totalorder %s13, 0
      %p86 = por %p84, %p85
      %p87 = scmp.ne.s32.totalorder %s73, %s74
      %p88 = scmp.eq.s32.totalorder %s14, 1
      %p89 = por %p87, %p88
      %p91 = scmp.ne.s32.totalorder %s74, %s90
      %p92 = scmp.eq.s32.totalorder %s14, 0
      %p93 = por %p91, %p92
      %p94 = scmp.le.s32.totalorder 1, %s8
      %p95 = scmp.lt.s32.totalorder %s8, 3
      %p96 = pnand %p94, %p95
      %p97 = pneg %p96
      // Predicated region
      $region9: #{tpu_custom_call.1} parent=5 // pred_check
        _
      $region10: #{tpu_custom_call.1} parent=5 // pred_check_branch
        %99 = sbr.rel (%p96) target = $region12
      $region11: #{tpu_custom_call.1} parent=5 // pred_region
        %s100 = ssub.s32 %s8, 1
      $region12: #{tpu_custom_call.1} parent=5 // pred_fallthru
        _
      %p101 = scmp.lt.s32.totalorder %s8, 2
      // Predicated region
      $region13: #{tpu_custom_call.1} parent=5 // pred_check
        %p102 = pneg %p101
      $region14: #{tpu_custom_call.1} parent=5 // pred_check_branch
        %104 = sbr.rel (%p102) target = $region16
      $region15: #{tpu_custom_call.1} parent=5 // pred_region
        // Predicated region
        $region17: #{tpu_custom_call.1} parent=15 // pred_check
          %p105 = pneg %p28
        $region18: #{tpu_custom_call.1} parent=15 // pred_check_branch
          %107 = sbr.rel (%p105) target = $region20
        $region19: #{tpu_custom_call.1} parent=15 // pred_region
          %s108 = smul.u32 32, %s8
          %s109 = ssub.s32 42, %s108
          %p110 = scmp.lt.s32.totalorder %s109, 32
          %s111 = scalar_select %p110, %s109, 32
          %s112 = smul.u32 128, %s111
          %p113 = scmp.lt.s32.totalorder %s108, 41
          %s114 = scalar_select %p113, %s108, 41
          %s115 = smul.addr %s114, 8
          %s116 = scalar_lea.vmem %s0, %s115
          %s117 = smul.u32 32, %s8
          %s118 = ssub.s32 42, %s117
          %p119 = scmp.lt.s32.totalorder %s118, 32
          %s120 = scalar_select %p119, %s118, 32
          %s121 = smul.u32 128, %s120
        $region20: #{tpu_custom_call.1} parent=15 // pred_fallthru
          _
        // Predicated region
        $region21: #{tpu_custom_call.1} parent=15 // pred_check
          %p122 = pneg %p54
        $region22: #{tpu_custom_call.1} parent=15 // pred_check_branch
          %124 = sbr.rel (%p122) target = $region24
        $region23: #{tpu_custom_call.1} parent=15 // pred_region
          %s125 = smul.u32 32, %s8
          %s126 = ssub.s32 42, %s125
          %p127 = scmp.lt.s32.totalorder %s126, 32
          %s128 = scalar_select %p127, %s126, 32
          %s129 = smul.u32 128, %s128
          %s130 = smul.u32 %s129, 2
          %p131 = scmp.lt.s32.totalorder %s125, 41
          %s132 = scalar_select %p131, %s125, 41
          %s133 = smul.addr %s132, 2
          %s134 = smul.addr %s133, 8
          %s135 = scalar_lea.vmem %s1, %s134
          %s136 = smul.u32 32, %s8
          %s137 = ssub.s32 42, %s136
          %p138 = scmp.lt.s32.totalorder %s137, 32
          %s139 = scalar_select %p138, %s137, 32
          %s140 = smul.u32 128, %s139
          %s141 = smul.u32 %s140, 2
        $region24: #{tpu_custom_call.1} parent=15 // pred_fallthru
          _
      $region16: #{tpu_custom_call.1} parent=5 // pred_fallthru
        _
      %p142 = scmp.le.s32.totalorder 1, %s8
      %p143 = scmp.lt.s32.totalorder %s8, 3
      %p144 = pnand %p142, %p143
      %p145 = pneg %p144
      // Predicated region
      $region25: #{tpu_custom_call.1} parent=5 // pred_check
        _
      $region26: #{tpu_custom_call.1} parent=5 // pred_check_branch
        %147 = sbr.rel (%p144) target = $region28
      $region27: #{tpu_custom_call.1} parent=5 // pred_region
        %s148 = ssub.s32 %s8, 1
        %s149 = smul.u32 32, %s13
        %s150 = ssub.s32 42, %s149
        %p151 = scmp.lt.s32.totalorder %s150, 32
        %s152 = scalar_select %p151, %s150, 32
        %s153 = smul.u32 128, %s152
        %p154 = scmp.lt.s32.totalorder %s149, 41
        %s155 = scalar_select %p154, %s149, 41
        %s156 = smul.addr %s155, 8
        %s157 = scalar_lea.vmem %s0, %s156
        %p158 = pneg %p34
        %p159 = pneg %p31
        %s160 = smul.u32 32, %s13
        %s161 = ssub.s32 42, %s160
        %p162 = scmp.lt.s32.totalorder %s161, 32
        %s163 = scalar_select %p162, %s161, 32
        %s164 = smul.u32 128, %s163
        %s165 = smul.u32 %s164, 2
        %p166 = scmp.lt.s32.totalorder %s160, 41
        %s167 = scalar_select %p166, %s160, 41
        %s168 = smul.addr %s167, 2
        %s169 = smul.addr %s168, 8
        %s170 = scalar_lea.vmem %s1, %s169
        %p171 = pneg %p60
        %p172 = pneg %p57
        %p173 = pneg %p86
        %p174 = pneg %p83
        %s175 = sand.u32 %s73, 1
        %s176 = sand.u32 %s73, 1
        %s177 = smul.addr %s176, 512
        %s178 = scalar_lea.vmem [#allocation2], %s177
        %s179 = smul.u32 32, %s13
        %s180 = ssub.s32 42, %s179
        %p181 = scmp.lt.s32.totalorder %s180, 32
        %s182 = scalar_select %p181, %s180, 32
        %s183 = smul.u32 128, %s182
        %p184 = scmp.lt.s32.totalorder %s179, 41
        %s185 = scalar_select %p184, %s179, 41
        %s186 = smul.addr %s185, 8
        %s187 = scalar_lea.vmem %s0, %s186
        %s188 = smul.u32 32, %s13
        %s189 = ssub.s32 42, %s188
        %p190 = scmp.lt.s32.totalorder %s189, 32
        %s191 = scalar_select %p190, %s189, 32
        %s192 = smul.u32 128, %s191
        %s193 = smul.u32 32, %s13
        %s194 = ssub.s32 42, %s193
        %p195 = scmp.lt.s32.totalorder %s194, 32
        %s196 = scalar_select %p195, %s194, 32
        %s197 = smul.u32 128, %s196
        %s198 = smul.u32 %s197, 2
        %p199 = scmp.lt.s32.totalorder %s193, 41
        %s200 = scalar_select %p199, %s193, 41
        %s201 = smul.addr %s200, 2
        %s202 = smul.addr %s201, 8
        %s203 = scalar_lea.vmem %s1, %s202
        %s204 = smul.u32 32, %s13
        %s205 = ssub.s32 42, %s204
        %p206 = scmp.lt.s32.totalorder %s205, 32
        %s207 = scalar_select %p206, %s205, 32
        %s208 = smul.u32 128, %s207
        %s209 = smul.u32 %s208, 2
        %s210 = smul.u32 32, %s13
        %s211 = ssub.s32 42, %s210
        %p212 = scmp.lt.s32.totalorder %s211, 32
        %s213 = scalar_select %p212, %s211, 32
        %s214 = smul.u32 128, %s213
        %s215 = smul.u32 %s214, 2
        %v216 = vld [vmem:[%s187] sm:$0xff]
        %v217 = vld [vmem:[%s187 + $0x8] sm:$0xff]
        %v218 = vld [vmem:[%s187 + $0x10] sm:$0xff]
        %v219 = vld [vmem:[%s187 + $0x18] sm:$0xff]
        %v220 = vld [vmem:[%s187 + $0x20] sm:$0xff]
        %v221 = vld [vmem:[%s187 + $0x28] sm:$0xff]
        %v222 = vld [vmem:[%s187 + $0x30] sm:$0xff]
        %v223 = vld [vmem:[%s187 + $0x38] sm:$0xff]
        %v224 = vld [vmem:[%s187 + $0x40] sm:$0xff]
        %v225 = vld [vmem:[%s187 + $0x48] sm:$0xff]
        %v226 = vld [vmem:[%s187 + $0x50] sm:$0xff]
        %v227 = vld [vmem:[%s187 + $0x58] sm:$0xff]
        %v228 = vld [vmem:[%s187 + $0x60] sm:$0xff]
        %v229 = vld [vmem:[%s187 + $0x68] sm:$0xff]
        %v230 = vld [vmem:[%s187 + $0x70] sm:$0xff]
        %v231 = vld [vmem:[%s187 + $0x78] sm:$0xff]
        %v232 = vld [vmem:[%s187 + $0x80] sm:$0xff]
        %v233 = vld [vmem:[%s187 + $0x88] sm:$0xff]
        %v234 = vld [vmem:[%s187 + $0x90] sm:$0xff]
        %v235 = vld [vmem:[%s187 + $0x98] sm:$0xff]
        %v236 = vld [vmem:[%s187 + $0xa0] sm:$0xff]
        %v237 = vld [vmem:[%s187 + $0xa8] sm:$0xff]
        %v238 = vld [vmem:[%s187 + $0xb0] sm:$0xff]
        %v239 = vld [vmem:[%s187 + $0xb8] sm:$0xff]
        %v240 = vld [vmem:[%s187 + $0xc0] sm:$0xff]
        %v241 = vld [vmem:[%s187 + $0xc8] sm:$0xff]
        %v242 = vld [vmem:[%s187 + $0xd0] sm:$0xff]
        %v243 = vld [vmem:[%s187 + $0xd8] sm:$0xff]
        %v244 = vld [vmem:[%s187 + $0xe0] sm:$0xff]
        %v245 = vld [vmem:[%s187 + $0xe8] sm:$0xff]
        %v246 = vld [vmem:[%s187 + $0xf0] sm:$0xff]
        %v247 = vld [vmem:[%s187 + $0xf8] sm:$0xff]
        %v248 = vxor.u32 %v216, 2147483648
        %v249 = vxor.u32 %v217, 2147483648
        %v250 = vxor.u32 %v218, 2147483648
        %v251 = vxor.u32 %v219, 2147483648
        %v252 = vxor.u32 %v220, 2147483648
        %v253 = vxor.u32 %v221, 2147483648
        %v254 = vxor.u32 %v222, 2147483648
        %v255 = vxor.u32 %v223, 2147483648
        %v256 = vxor.u32 %v224, 2147483648
        %v257 = vxor.u32 %v225, 2147483648
        %v258 = vxor.u32 %v226, 2147483648
        %v259 = vxor.u32 %v227, 2147483648
        %v260 = vxor.u32 %v228, 2147483648
        %v261 = vxor.u32 %v229, 2147483648
        %v262 = vxor.u32 %v230, 2147483648
        %v263 = vxor.u32 %v231, 2147483648
        %v264 = vxor.u32 %v232, 2147483648
        %v265 = vxor.u32 %v233, 2147483648
        %v266 = vxor.u32 %v234, 2147483648
        %v267 = vxor.u32 %v235, 2147483648
        %v268 = vxor.u32 %v236, 2147483648
        %v269 = vxor.u32 %v237, 2147483648
        %v270 = vxor.u32 %v238, 2147483648
        %v271 = vxor.u32 %v239, 2147483648
        %v272 = vxor.u32 %v240, 2147483648
        %v273 = vxor.u32 %v241, 2147483648
        %v274 = vxor.u32 %v242, 2147483648
        %v275 = vxor.u32 %v243, 2147483648
        %v276 = vxor.u32 %v244, 2147483648
        %v277 = vxor.u32 %v245, 2147483648
        %v278 = vxor.u32 %v246, 2147483648
        %v279 = vxor.u32 %v247, 2147483648
        %v280 = vmul.f32 %v248, 1.442695
        %v281 = vpow.pop %v280
        %v282 = vmul.f32 %v249, 1.442695
        %v283 = vpow.pop %v282
        %v284 = vmul.f32 %v250, 1.442695
        %v285 = vpow.pop %v284
        %v286 = vmul.f32 %v251, 1.442695
        %v287 = vpow.pop %v286
        %v288 = vmul.f32 %v252, 1.442695
        %v289 = vpow.pop %v288
        %v290 = vmul.f32 %v253, 1.442695
        %v291 = vpow.pop %v290
        %v292 = vmul.f32 %v254, 1.442695
        %v293 = vpow.pop %v292
        %v294 = vmul.f32 %v255, 1.442695
        %v295 = vpow.pop %v294
        %v296 = vmul.f32 %v256, 1.442695
        %v297 = vpow.pop %v296
        %v298 = vmul.f32 %v257, 1.442695
        %v299 = vpow.pop %v298
        %v300 = vmul.f32 %v258, 1.442695
        %v301 = vpow.pop %v300
        %v302 = vmul.f32 %v259, 1.442695
        %v303 = vpow.pop %v302
        %v304 = vmul.f32 %v260, 1.442695
        %v305 = vpow.pop %v304
        %v306 = vmul.f32 %v261, 1.442695
        %v307 = vpow.pop %v306
        %v308 = vmul.f32 %v262, 1.442695
        %v309 = vpow.pop %v308
        %v310 = vmul.f32 %v263, 1.442695
        %v311 = vpow.pop %v310
        %v312 = vmul.f32 %v264, 1.442695
        %v313 = vpow.pop %v312
        %v314 = vmul.f32 %v265, 1.442695
        %v315 = vpow.pop %v314
        %v316 = vmul.f32 %v266, 1.442695
        %v317 = vpow.pop %v316
        %v318 = vmul.f32 %v267, 1.442695
        %v319 = vpow.pop %v318
        %v320 = vmul.f32 %v268, 1.442695
        %v321 = vpow.pop %v320
        %v322 = vmul.f32 %v269, 1.442695
        %v323 = vpow.pop %v322
        %v324 = vmul.f32 %v270, 1.442695
        %v325 = vpow.pop %v324
        %v326 = vmul.f32 %v271, 1.442695
        %v327 = vpow.pop %v326
        %v328 = vmul.f32 %v272, 1.442695
        %v329 = vpow.pop %v328
        %v330 = vmul.f32 %v273, 1.442695
        %v331 = vpow.pop %v330
        %v332 = vmul.f32 %v274, 1.442695
        %v333 = vpow.pop %v332
        %v334 = vmul.f32 %v275, 1.442695
        %v335 = vpow.pop %v334
        %v336 = vmul.f32 %v276, 1.442695
        %v337 = vpow.pop %v336
        %v338 = vmul.f32 %v277, 1.442695
        %v339 = vpow.pop %v338
        %v340 = vmul.f32 %v278, 1.442695
        %v341 = vpow.pop %v340
        %v342 = vmul.f32 %v279, 1.442695
        %v343 = vpow.pop %v342
        %v344 = vadd.f32 %v281, 1.0
        %v345 = vadd.f32 %v283, 1.0
        %v346 = vadd.f32 %v285, 1.0
        %v347 = vadd.f32 %v287, 1.0
        %v348 = vadd.f32 %v289, 1.0
        %v349 = vadd.f32 %v291, 1.0
        %v350 = vadd.f32 %v293, 1.0
        %v351 = vadd.f32 %v295, 1.0
        %v352 = vadd.f32 %v297, 1.0
        %v353 = vadd.f32 %v299, 1.0
        %v354 = vadd.f32 %v301, 1.0
        %v355 = vadd.f32 %v303, 1.0
        %v356 = vadd.f32 %v305, 1.0
        %v357 = vadd.f32 %v307, 1.0
        %v358 = vadd.f32 %v309, 1.0
        %v359 = vadd.f32 %v311, 1.0
        %v360 = vadd.f32 %v313, 1.0
        %v361 = vadd.f32 %v315, 1.0
        %v362 = vadd.f32 %v317, 1.0
        %v363 = vadd.f32 %v319, 1.0
        %v364 = vadd.f32 %v321, 1.0
        %v365 = vadd.f32 %v323, 1.0
        %v366 = vadd.f32 %v325, 1.0
        %v367 = vadd.f32 %v327, 1.0
        %v368 = vadd.f32 %v329, 1.0
        %v369 = vadd.f32 %v331, 1.0
        %v370 = vadd.f32 %v333, 1.0
        %v371 = vadd.f32 %v335, 1.0
        %v372 = vadd.f32 %v337, 1.0
        %v373 = vadd.f32 %v339, 1.0
        %v374 = vadd.f32 %v341, 1.0
        %v375 = vadd.f32 %v343, 1.0
        %v376 = vrcp.pop %v344
        %v377 = vmul.f32 1.0, %v376
        %v378 = vrcp.pop %v345
        %v379 = vmul.f32 1.0, %v378
        %v380 = vrcp.pop %v346
        %v381 = vmul.f32 1.0, %v380
        %v382 = vrcp.pop %v347
        %v383 = vmul.f32 1.0, %v382
        %v384 = vrcp.pop %v348
        %v385 = vmul.f32 1.0, %v384
        %v386 = vrcp.pop %v349
        %v387 = vmul.f32 1.0, %v386
        %v388 = vrcp.pop %v350
        %v389 = vmul.f32 1.0, %v388
        %v390 = vrcp.pop %v351
        %v391 = vmul.f32 1.0, %v390
        %v392 = vrcp.pop %v352
        %v393 = vmul.f32 1.0, %v392
        %v394 = vrcp.pop %v353
        %v395 = vmul.f32 1.0, %v394
        %v396 = vrcp.pop %v354
        %v397 = vmul.f32 1.0, %v396
        %v398 = vrcp.pop %v355
        %v399 = vmul.f32 1.0, %v398
        %v400 = vrcp.pop %v356
        %v401 = vmul.f32 1.0, %v400
        %v402 = vrcp.pop %v357
        %v403 = vmul.f32 1.0, %v402
        %v404 = vrcp.pop %v358
        %v405 = vmul.f32 1.0, %v404
        %v406 = vrcp.pop %v359
        %v407 = vmul.f32 1.0, %v406
        %v408 = vrcp.pop %v360
        %v409 = vmul.f32 1.0, %v408
        %v410 = vrcp.pop %v361
        %v411 = vmul.f32 1.0, %v410
        %v412 = vrcp.pop %v362
        %v413 = vmul.f32 1.0, %v412
        %v414 = vrcp.pop %v363
        %v415 = vmul.f32 1.0, %v414
        %v416 = vrcp.pop %v364
        %v417 = vmul.f32 1.0, %v416
        %v418 = vrcp.pop %v365
        %v419 = vmul.f32 1.0, %v418
        %v420 = vrcp.pop %v366
        %v421 = vmul.f32 1.0, %v420
        %v422 = vrcp.pop %v367
        %v423 = vmul.f32 1.0, %v422
        %v424 = vrcp.pop %v368
        %v425 = vmul.f32 1.0, %v424
        %v426 = vrcp.pop %v369
        %v427 = vmul.f32 1.0, %v426
        %v428 = vrcp.pop %v370
        %v429 = vmul.f32 1.0, %v428
        %v430 = vrcp.pop %v371
        %v431 = vmul.f32 1.0, %v430
        %v432 = vrcp.pop %v372
        %v433 = vmul.f32 1.0, %v432
        %v434 = vrcp.pop %v373
        %v435 = vmul.f32 1.0, %v434
        %v436 = vrcp.pop %v374
        %v437 = vmul.f32 1.0, %v436
        %v438 = vrcp.pop %v375
        %v439 = vmul.f32 1.0, %v438
        %v440 = vld [vmem:[%s203] sm:$0xff]
        %v441 = vld [vmem:[%s203 + $0x8] sm:$0xff]
        %v442 = vld [vmem:[%s203 + $0x10] sm:$0xff]
        %v443 = vld [vmem:[%s203 + $0x18] sm:$0xff]
        %v444 = vld [vmem:[%s203 + $0x20] sm:$0xff]
        %v445 = vld [vmem:[%s203 + $0x28] sm:$0xff]
        %v446 = vld [vmem:[%s203 + $0x30] sm:$0xff]
        %v447 = vld [vmem:[%s203 + $0x38] sm:$0xff]
        %v448 = vld [vmem:[%s203 + $0x40] sm:$0xff]
        %v449 = vld [vmem:[%s203 + $0x48] sm:$0xff]
        %v450 = vld [vmem:[%s203 + $0x50] sm:$0xff]
        %v451 = vld [vmem:[%s203 + $0x58] sm:$0xff]
        %v452 = vld [vmem:[%s203 + $0x60] sm:$0xff]
        %v453 = vld [vmem:[%s203 + $0x68] sm:$0xff]
        %v454 = vld [vmem:[%s203 + $0x70] sm:$0xff]
        %v455 = vld [vmem:[%s203 + $0x78] sm:$0xff]
        %v456 = vld [vmem:[%s203 + $0x80] sm:$0xff]
        %v457 = vld [vmem:[%s203 + $0x88] sm:$0xff]
        %v458 = vld [vmem:[%s203 + $0x90] sm:$0xff]
        %v459 = vld [vmem:[%s203 + $0x98] sm:$0xff]
        %v460 = vld [vmem:[%s203 + $0xa0] sm:$0xff]
        %v461 = vld [vmem:[%s203 + $0xa8] sm:$0xff]
        %v462 = vld [vmem:[%s203 + $0xb0] sm:$0xff]
        %v463 = vld [vmem:[%s203 + $0xb8] sm:$0xff]
        %v464 = vld [vmem:[%s203 + $0xc0] sm:$0xff]
        %v465 = vld [vmem:[%s203 + $0xc8] sm:$0xff]
        %v466 = vld [vmem:[%s203 + $0xd0] sm:$0xff]
        %v467 = vld [vmem:[%s203 + $0xd8] sm:$0xff]
        %v468 = vld [vmem:[%s203 + $0xe0] sm:$0xff]
        %v469 = vld [vmem:[%s203 + $0xe8] sm:$0xff]
        %v470 = vld [vmem:[%s203 + $0xf0] sm:$0xff]
        %v471 = vld [vmem:[%s203 + $0xf8] sm:$0xff]
        %v472 = vld [vmem:[%s203 + $0x100] sm:$0xff]
        %v473 = vld [vmem:[%s203 + $0x108] sm:$0xff]
        %v474 = vld [vmem:[%s203 + $0x110] sm:$0xff]
        %v475 = vld [vmem:[%s203 + $0x118] sm:$0xff]
        %v476 = vld [vmem:[%s203 + $0x120] sm:$0xff]
        %v477 = vld [vmem:[%s203 + $0x128] sm:$0xff]
        %v478 = vld [vmem:[%s203 + $0x130] sm:$0xff]
        %v479 = vld [vmem:[%s203 + $0x138] sm:$0xff]
        %v480 = vld [vmem:[%s203 + $0x140] sm:$0xff]
        %v481 = vld [vmem:[%s203 + $0x148] sm:$0xff]
        %v482 = vld [vmem:[%s203 + $0x150] sm:$0xff]
        %v483 = vld [vmem:[%s203 + $0x158] sm:$0xff]
        %v484 = vld [vmem:[%s203 + $0x160] sm:$0xff]
        %v485 = vld [vmem:[%s203 + $0x168] sm:$0xff]
        %v486 = vld [vmem:[%s203 + $0x170] sm:$0xff]
        %v487 = vld [vmem:[%s203 + $0x178] sm:$0xff]
        %v488 = vld [vmem:[%s203 + $0x180] sm:$0xff]
        %v489 = vld [vmem:[%s203 + $0x188] sm:$0xff]
        %v490 = vld [vmem:[%s203 + $0x190] sm:$0xff]
        %v491 = vld [vmem:[%s203 + $0x198] sm:$0xff]
        %v492 = vld [vmem:[%s203 + $0x1a0] sm:$0xff]
        %v493 = vld [vmem:[%s203 + $0x1a8] sm:$0xff]
        %v494 = vld [vmem:[%s203 + $0x1b0] sm:$0xff]
        %v495 = vld [vmem:[%s203 + $0x1b8] sm:$0xff]
        %v496 = vld [vmem:[%s203 + $0x1c0] sm:$0xff]
        %v497 = vld [vmem:[%s203 + $0x1c8] sm:$0xff]
        %v498 = vld [vmem:[%s203 + $0x1d0] sm:$0xff]
        %v499 = vld [vmem:[%s203 + $0x1d8] sm:$0xff]
        %v500 = vld [vmem:[%s203 + $0x1e0] sm:$0xff]
        %v501 = vld [vmem:[%s203 + $0x1e8] sm:$0xff]
        %v502 = vld [vmem:[%s203 + $0x1f0] sm:$0xff]
        %v503 = vld [vmem:[%s203 + $0x1f8] sm:$0xff]
        %505 = vset.pattern.permute.xlu0 0
        %506 = vperm.xlu0 %505, %v377
        %v507 = vpop.permute.xlu0 %506
        %510 = vset.pattern.permute.xlu0 0
        %511 = vperm.xlu0 %510, %v379
        %v512 = vpop.permute.xlu0 %511
        %515 = vset.pattern.permute.xlu0 0
        %516 = vperm.xlu0 %515, %v381
        %v517 = vpop.permute.xlu0 %516
        %520 = vset.pattern.permute.xlu0 0
        %521 = vperm.xlu0 %520, %v383
        %v522 = vpop.permute.xlu0 %521
        %525 = vset.pattern.permute.xlu0 0
        %526 = vperm.xlu0 %525, %v385
        %v527 = vpop.permute.xlu0 %526
        %530 = vset.pattern.permute.xlu0 0
        %531 = vperm.xlu0 %530, %v387
        %v532 = vpop.permute.xlu0 %531
        %535 = vset.pattern.permute.xlu0 0
        %536 = vperm.xlu0 %535, %v389
        %v537 = vpop.permute.xlu0 %536
        %540 = vset.pattern.permute.xlu0 0
        %541 = vperm.xlu0 %540, %v391
        %v542 = vpop.permute.xlu0 %541
        %545 = vset.pattern.permute.xlu0 0
        %546 = vperm.xlu0 %545, %v393
        %v547 = vpop.permute.xlu0 %546
        %550 = vset.pattern.permute.xlu0 0
        %551 = vperm.xlu0 %550, %v395
        %v552 = vpop.permute.xlu0 %551
        %555 = vset.pattern.permute.xlu0 0
        %556 = vperm.xlu0 %555, %v397
        %v557 = vpop.permute.xlu0 %556
        %560 = vset.pattern.permute.xlu0 0
        %561 = vperm.xlu0 %560, %v399
        %v562 = vpop.permute.xlu0 %561
        %565 = vset.pattern.permute.xlu0 0
        %566 = vperm.xlu0 %565, %v401
        %v567 = vpop.permute.xlu0 %566
        %570 = vset.pattern.permute.xlu0 0
        %571 = vperm.xlu0 %570, %v403
        %v572 = vpop.permute.xlu0 %571
        %575 = vset.pattern.permute.xlu0 0
        %576 = vperm.xlu0 %575, %v405
        %v577 = vpop.permute.xlu0 %576
        %580 = vset.pattern.permute.xlu0 0
        %581 = vperm.xlu0 %580, %v407
        %v582 = vpop.permute.xlu0 %581
        %585 = vset.pattern.permute.xlu0 0
        %586 = vperm.xlu0 %585, %v409
        %v587 = vpop.permute.xlu0 %586
        %590 = vset.pattern.permute.xlu0 0
        %591 = vperm.xlu0 %590, %v411
        %v592 = vpop.permute.xlu0 %591
        %595 = vset.pattern.permute.xlu0 0
        %596 = vperm.xlu0 %595, %v413
        %v597 = vpop.permute.xlu0 %596
        %600 = vset.pattern.permute.xlu0 0
        %601 = vperm.xlu0 %600, %v415
        %v602 = vpop.permute.xlu0 %601
        %605 = vset.pattern.permute.xlu0 0
        %606 = vperm.xlu0 %605, %v417
        %v607 = vpop.permute.xlu0 %606
        %610 = vset.pattern.permute.xlu0 0
        %611 = vperm.xlu0 %610, %v419
        %v612 = vpop.permute.xlu0 %611
        %615 = vset.pattern.permute.xlu0 0
        %616 = vperm.xlu0 %615, %v421
        %v617 = vpop.permute.xlu0 %616
        %620 = vset.pattern.permute.xlu0 0
        %621 = vperm.xlu0 %620, %v423
        %v622 = vpop.permute.xlu0 %621
        %625 = vset.pattern.permute.xlu0 0
        %626 = vperm.xlu0 %625, %v425
        %v627 = vpop.permute.xlu0 %626
        %630 = vset.pattern.permute.xlu0 0
        %631 = vperm.xlu0 %630, %v427
        %v632 = vpop.permute.xlu0 %631
        %635 = vset.pattern.permute.xlu0 0
        %636 = vperm.xlu0 %635, %v429
        %v637 = vpop.permute.xlu0 %636
        %640 = vset.pattern.permute.xlu0 0
        %641 = vperm.xlu0 %640, %v431
        %v642 = vpop.permute.xlu0 %641
        %645 = vset.pattern.permute.xlu0 0
        %646 = vperm.xlu0 %645, %v433
        %v647 = vpop.permute.xlu0 %646
        %650 = vset.pattern.permute.xlu0 0
        %651 = vperm.xlu0 %650, %v435
        %v652 = vpop.permute.xlu0 %651
        %655 = vset.pattern.permute.xlu0 0
        %656 = vperm.xlu0 %655, %v437
        %v657 = vpop.permute.xlu0 %656
        %660 = vset.pattern.permute.xlu0 0
        %661 = vperm.xlu0 %660, %v439
        %v662 = vpop.permute.xlu0 %661
        %v664 = vmul.f32 %v507, %v440
        %v665 = vmul.f32 %v507, %v441
        %v666 = vmul.f32 %v512, %v442
        %v667 = vmul.f32 %v512, %v443
        %v668 = vmul.f32 %v517, %v444
        %v669 = vmul.f32 %v517, %v445
        %v670 = vmul.f32 %v522, %v446
        %v671 = vmul.f32 %v522, %v447
        %v672 = vmul.f32 %v527, %v448
        %v673 = vmul.f32 %v527, %v449
        %v674 = vmul.f32 %v532, %v450
        %v675 = vmul.f32 %v532, %v451
        %v676 = vmul.f32 %v537, %v452
        %v677 = vmul.f32 %v537, %v453
        %v678 = vmul.f32 %v542, %v454
        %v679 = vmul.f32 %v542, %v455
        %v680 = vmul.f32 %v547, %v456
        %v681 = vmul.f32 %v547, %v457
        %v682 = vmul.f32 %v552, %v458
        %v683 = vmul.f32 %v552, %v459
        %v684 = vmul.f32 %v557, %v460
        %v685 = vmul.f32 %v557, %v461
        %v686 = vmul.f32 %v562, %v462
        %v687 = vmul.f32 %v562, %v463
        %v688 = vmul.f32 %v567, %v464
        %v689 = vmul.f32 %v567, %v465
        %v690 = vmul.f32 %v572, %v466
        %v691 = vmul.f32 %v572, %v467
        %v692 = vmul.f32 %v577, %v468
        %v693 = vmul.f32 %v577, %v469
        %v694 = vmul.f32 %v582, %v470
        %v695 = vmul.f32 %v582, %v471
        %v696 = vmul.f32 %v587, %v472
        %v697 = vmul.f32 %v587, %v473
        %v698 = vmul.f32 %v592, %v474
        %v699 = vmul.f32 %v592, %v475
        %v700 = vmul.f32 %v597, %v476
        %v701 = vmul.f32 %v597, %v477
        %v702 = vmul.f32 %v602, %v478
        %v703 = vmul.f32 %v602, %v479
        %v704 = vmul.f32 %v607, %v480
        %v705 = vmul.f32 %v607, %v481
        %v706 = vmul.f32 %v612, %v482
        %v707 = vmul.f32 %v612, %v483
        %v708 = vmul.f32 %v617, %v484
        %v709 = vmul.f32 %v617, %v485
        %v710 = vmul.f32 %v622, %v486
        %v711 = vmul.f32 %v622, %v487
        %v712 = vmul.f32 %v627, %v488
        %v713 = vmul.f32 %v627, %v489
        %v714 = vmul.f32 %v632, %v490
        %v715 = vmul.f32 %v632, %v491
        %v716 = vmul.f32 %v637, %v492
        %v717 = vmul.f32 %v637, %v493
        %v718 = vmul.f32 %v642, %v494
        %v719 = vmul.f32 %v642, %v495
        %v720 = vmul.f32 %v647, %v496
        %v721 = vmul.f32 %v647, %v497
        %v722 = vmul.f32 %v652, %v498
        %v723 = vmul.f32 %v652, %v499
        %v724 = vmul.f32 %v657, %v500
        %v725 = vmul.f32 %v657, %v501
        %v726 = vmul.f32 %v662, %v502
        %v727 = vmul.f32 %v662, %v503
        %728 = vst [vmem:[%s178] sm:$0xff] %v664
        %vm729 = vcmask 556032
        %730 = vst.msk [vmem:[%s178 + $0x8] sm:$0xff] %vm729, %v665
        %731 = vst [vmem:[%s178 + $0x10] sm:$0xff] %v666
        %732 = vst.msk [vmem:[%s178 + $0x18] sm:$0xff] %vm729, %v667
        %733 = vst [vmem:[%s178 + $0x20] sm:$0xff] %v668
        %734 = vst.msk [vmem:[%s178 + $0x28] sm:$0xff] %vm729, %v669
        %735 = vst [vmem:[%s178 + $0x30] sm:$0xff] %v670
        %736 = vst.msk [vmem:[%s178 + $0x38] sm:$0xff] %vm729, %v671
        %737 = vst [vmem:[%s178 + $0x40] sm:$0xff] %v672
        %738 = vst.msk [vmem:[%s178 + $0x48] sm:$0xff] %vm729, %v673
        %739 = vst [vmem:[%s178 + $0x50] sm:$0xff] %v674
        %740 = vst.msk [vmem:[%s178 + $0x58] sm:$0xff] %vm729, %v675
        %741 = vst [vmem:[%s178 + $0x60] sm:$0xff] %v676
        %742 = vst.msk [vmem:[%s178 + $0x68] sm:$0xff] %vm729, %v677
        %743 = vst [vmem:[%s178 + $0x70] sm:$0xff] %v678
        %744 = vst.msk [vmem:[%s178 + $0x78] sm:$0xff] %vm729, %v679
        %745 = vst [vmem:[%s178 + $0x80] sm:$0xff] %v680
        %746 = vst.msk [vmem:[%s178 + $0x88] sm:$0xff] %vm729, %v681
        %747 = vst [vmem:[%s178 + $0x90] sm:$0xff] %v682
        %748 = vst.msk [vmem:[%s178 + $0x98] sm:$0xff] %vm729, %v683
        %749 = vst [vmem:[%s178 + $0xa0] sm:$0xff] %v684
        %750 = vst.msk [vmem:[%s178 + $0xa8] sm:$0xff] %vm729, %v685
        %751 = vst [vmem:[%s178 + $0xb0] sm:$0xff] %v686
        %752 = vst.msk [vmem:[%s178 + $0xb8] sm:$0xff] %vm729, %v687
        %753 = vst [vmem:[%s178 + $0xc0] sm:$0xff] %v688
        %754 = vst.msk [vmem:[%s178 + $0xc8] sm:$0xff] %vm729, %v689
        %755 = vst [vmem:[%s178 + $0xd0] sm:$0xff] %v690
        %756 = vst.msk [vmem:[%s178 + $0xd8] sm:$0xff] %vm729, %v691
        %757 = vst [vmem:[%s178 + $0xe0] sm:$0xff] %v692
        %758 = vst.msk [vmem:[%s178 + $0xe8] sm:$0xff] %vm729, %v693
        %759 = vst [vmem:[%s178 + $0xf0] sm:$0xff] %v694
        %760 = vst.msk [vmem:[%s178 + $0xf8] sm:$0xff] %vm729, %v695
        %761 = vst [vmem:[%s178 + $0x100] sm:$0xff] %v696
        %762 = vst.msk [vmem:[%s178 + $0x108] sm:$0xff] %vm729, %v697
        %763 = vst [vmem:[%s178 + $0x110] sm:$0xff] %v698
        %764 = vst.msk [vmem:[%s178 + $0x118] sm:$0xff] %vm729, %v699
        %765 = vst [vmem:[%s178 + $0x120] sm:$0xff] %v700
        %766 = vst.msk [vmem:[%s178 + $0x128] sm:$0xff] %vm729, %v701
        %767 = vst [vmem:[%s178 + $0x130] sm:$0xff] %v702
        %768 = vst.msk [vmem:[%s178 + $0x138] sm:$0xff] %vm729, %v703
        %769 = vst [vmem:[%s178 + $0x140] sm:$0xff] %v704
        %770 = vst.msk [vmem:[%s178 + $0x148] sm:$0xff] %vm729, %v705
        %771 = vst [vmem:[%s178 + $0x150] sm:$0xff] %v706
        %772 = vst.msk [vmem:[%s178 + $0x158] sm:$0xff] %vm729, %v707
        %773 = vst [vmem:[%s178 + $0x160] sm:$0xff] %v708
        %774 = vst.msk [vmem:[%s178 + $0x168] sm:$0xff] %vm729, %v709
        %775 = vst [vmem:[%s178 + $0x170] sm:$0xff] %v710
        %776 = vst.msk [vmem:[%s178 + $0x178] sm:$0xff] %vm729, %v711
        %777 = vst [vmem:[%s178 + $0x180] sm:$0xff] %v712
        %778 = vst.msk [vmem:[%s178 + $0x188] sm:$0xff] %vm729, %v713
        %779 = vst [vmem:[%s178 + $0x190] sm:$0xff] %v714
        %780 = vst.msk [vmem:[%s178 + $0x198] sm:$0xff] %vm729, %v715
        %781 = vst [vmem:[%s178 + $0x1a0] sm:$0xff] %v716
        %782 = vst.msk [vmem:[%s178 + $0x1a8] sm:$0xff] %vm729, %v717
        %783 = vst [vmem:[%s178 + $0x1b0] sm:$0xff] %v718
        %784 = vst.msk [vmem:[%s178 + $0x1b8] sm:$0xff] %vm729, %v719
        %785 = vst [vmem:[%s178 + $0x1c0] sm:$0xff] %v720
        %786 = vst.msk [vmem:[%s178 + $0x1c8] sm:$0xff] %vm729, %v721
        %787 = vst [vmem:[%s178 + $0x1d0] sm:$0xff] %v722
        %788 = vst.msk [vmem:[%s178 + $0x1d8] sm:$0xff] %vm729, %v723
        %789 = vst [vmem:[%s178 + $0x1e0] sm:$0xff] %v724
        %790 = vst.msk [vmem:[%s178 + $0x1e8] sm:$0xff] %vm729, %v725
        %791 = vst [vmem:[%s178 + $0x1f0] sm:$0xff] %v726
        %792 = vst.msk [vmem:[%s178 + $0x1f8] sm:$0xff] %vm729, %v727
        %s793 = sand.u32 %s73, 1
        %s794 = sand.u32 %s73, 1
        %s795 = smul.addr %s794, 512
        %s796 = scalar_lea.vmem [#allocation2], %s795
        // Predicated region
        $region29: #{tpu_custom_call.1} parent=27 // pred_check
          %p797 = pneg %p83
        $region30: #{tpu_custom_call.1} parent=27 // pred_check_branch
          %799 = sbr.rel (%p797) target = $region32
        $region31: #{tpu_custom_call.1} parent=27 // pred_region
          %s800 = smul.u32 32, %s13
          %s801 = ssub.s32 42, %s800
          %p802 = scmp.lt.s32.totalorder %s801, 32
          %s803 = scalar_select %p802, %s801, 32
          %s804 = smul.u32 128, %s803
          %s805 = smul.u32 %s804, 2
          %p806 = scmp.ne.s32.totalorder 0, %s805
          %s807 = smul.addr %s800, 2
          %s808 = smul.addr %s807, 8
          %s809 = scalar_lea.vmem %s2, %s808
          // Predicated region
          $region33: #{tpu_custom_call.1} parent=31 // pred_check
            %p810 = pneg %p806
          $region34: #{tpu_custom_call.1} parent=31 // pred_check_branch
            %812 = sbr.rel (%p810) target = $region36
          $region35: #{tpu_custom_call.1} parent=31 // pred_region
            // Predicated region
            $region37: #{tpu_custom_call.1} parent=35 // pred_check
              _
            $region38: #{tpu_custom_call.1} parent=35 // pred_check_branch
              %814 = sbr.rel (0) target = $region40
            $region39: #{tpu_custom_call.1} parent=35 // pred_region
              %s815 = sshrl.u32 %s803, 5
              // While loop
              $region41: #{tpu_custom_call.1} parent=39 // loop_pre_header
                _
              $region42: #{tpu_custom_call.1} parent=39 // loop_header
                %s817 = sphi 0, %s819
                %p818 = scmp.ge.s32.totalorder %s817, %s815
                %s822 = sphi 0, %s955
                %s823 = sphi %s796, %s958
                %s824 = sphi %s809, %s959
              $region43: #{tpu_custom_call.1} parent=39 // loop_header_branch
                %821 = sbr.rel (%p818) target = $region47
              $region44: #{tpu_custom_call.1} parent=39 // loop_body
                %v825 = vld [vmem:[%s823] sm:$0xff]
                %826 = vst [vmem:[%s824] sm:$0xff] %v825
                %v827 = vld [vmem:[%s823 + $0x10] sm:$0xff]
                %828 = vst [vmem:[%s824 + $0x10] sm:$0xff] %v827
                %v829 = vld [vmem:[%s823 + $0x20] sm:$0xff]
                %830 = vst [vmem:[%s824 + $0x20] sm:$0xff] %v829
                %v831 = vld [vmem:[%s823 + $0x30] sm:$0xff]
                %832 = vst [vmem:[%s824 + $0x30] sm:$0xff] %v831
                %v833 = vld [vmem:[%s823 + $0x40] sm:$0xff]
                %834 = vst [vmem:[%s824 + $0x40] sm:$0xff] %v833
                %v835 = vld [vmem:[%s823 + $0x50] sm:$0xff]
                %836 = vst [vmem:[%s824 + $0x50] sm:$0xff] %v835
                %v837 = vld [vmem:[%s823 + $0x60] sm:$0xff]
                %838 = vst [vmem:[%s824 + $0x60] sm:$0xff] %v837
                %v839 = vld [vmem:[%s823 + $0x70] sm:$0xff]
                %840 = vst [vmem:[%s824 + $0x70] sm:$0xff] %v839
                %v841 = vld [vmem:[%s823 + $0x80] sm:$0xff]
                %842 = vst [vmem:[%s824 + $0x80] sm:$0xff] %v841
                %v843 = vld [vmem:[%s823 + $0x90] sm:$0xff]
                %844 = vst [vmem:[%s824 + $0x90] sm:$0xff] %v843
                %v845 = vld [vmem:[%s823 + $0xa0] sm:$0xff]
                %846 = vst [vmem:[%s824 + $0xa0] sm:$0xff] %v845
                %v847 = vld [vmem:[%s823 + $0xb0] sm:$0xff]
                %848 = vst [vmem:[%s824 + $0xb0] sm:$0xff] %v847
                %v849 = vld [vmem:[%s823 + $0xc0] sm:$0xff]
                %850 = vst [vmem:[%s824 + $0xc0] sm:$0xff] %v849
                %v851 = vld [vmem:[%s823 + $0xd0] sm:$0xff]
                %852 = vst [vmem:[%s824 + $0xd0] sm:$0xff] %v851
                %v853 = vld [vmem:[%s823 + $0xe0] sm:$0xff]
                %854 = vst [vmem:[%s824 + $0xe0] sm:$0xff] %v853
                %v855 = vld [vmem:[%s823 + $0xf0] sm:$0xff]
                %856 = vst [vmem:[%s824 + $0xf0] sm:$0xff] %v855
                %v857 = vld [vmem:[%s823 + $0x100] sm:$0xff]
                %858 = vst [vmem:[%s824 + $0x100] sm:$0xff] %v857
                %v859 = vld [vmem:[%s823 + $0x110] sm:$0xff]
                %860 = vst [vmem:[%s824 + $0x110] sm:$0xff] %v859
                %v861 = vld [vmem:[%s823 + $0x120] sm:$0xff]
                %862 = vst [vmem:[%s824 + $0x120] sm:$0xff] %v861
                %v863 = vld [vmem:[%s823 + $0x130] sm:$0xff]
                %864 = vst [vmem:[%s824 + $0x130] sm:$0xff] %v863
                %v865 = vld [vmem:[%s823 + $0x140] sm:$0xff]
                %866 = vst [vmem:[%s824 + $0x140] sm:$0xff] %v865
                %v867 = vld [vmem:[%s823 + $0x150] sm:$0xff]
                %868 = vst [vmem:[%s824 + $0x150] sm:$0xff] %v867
                %v869 = vld [vmem:[%s823 + $0x160] sm:$0xff]
                %870 = vst [vmem:[%s824 + $0x160] sm:$0xff] %v869
                %v871 = vld [vmem:[%s823 + $0x170] sm:$0xff]
                %872 = vst [vmem:[%s824 + $0x170] sm:$0xff] %v871
                %v873 = vld [vmem:[%s823 + $0x180] sm:$0xff]
                %874 = vst [vmem:[%s824 + $0x180] sm:$0xff] %v873
                %v875 = vld [vmem:[%s823 + $0x190] sm:$0xff]
                %876 = vst [vmem:[%s824 + $0x190] sm:$0xff] %v875
                %v877 = vld [vmem:[%s823 + $0x1a0] sm:$0xff]
                %878 = vst [vmem:[%s824 + $0x1a0] sm:$0xff] %v877
                %v879 = vld [vmem:[%s823 + $0x1b0] sm:$0xff]
                %880 = vst [vmem:[%s824 + $0x1b0] sm:$0xff] %v879
                %v881 = vld [vmem:[%s823 + $0x1c0] sm:$0xff]
                %882 = vst [vmem:[%s824 + $0x1c0] sm:$0xff] %v881
                %v883 = vld [vmem:[%s823 + $0x1d0] sm:$0xff]
                %884 = vst [vmem:[%s824 + $0x1d0] sm:$0xff] %v883
                %v885 = vld [vmem:[%s823 + $0x1e0] sm:$0xff]
                %886 = vst [vmem:[%s824 + $0x1e0] sm:$0xff] %v885
                %v887 = vld [vmem:[%s823 + $0x1f0] sm:$0xff]
                %888 = vst [vmem:[%s824 + $0x1f0] sm:$0xff] %v887
                %v889 = vld [vmem:[%s823 + $0x8] sm:$0xff]
                %890 = vst [vmem:[%s824 + $0x8] sm:$0xff] %v889
                %v891 = vld [vmem:[%s823 + $0x18] sm:$0xff]
                %892 = vst [vmem:[%s824 + $0x18] sm:$0xff] %v891
                %v893 = vld [vmem:[%s823 + $0x28] sm:$0xff]
                %894 = vst [vmem:[%s824 + $0x28] sm:$0xff] %v893
                %v895 = vld [vmem:[%s823 + $0x38] sm:$0xff]
                %896 = vst [vmem:[%s824 + $0x38] sm:$0xff] %v895
                %v897 = vld [vmem:[%s823 + $0x48] sm:$0xff]
                %898 = vst [vmem:[%s824 + $0x48] sm:$0xff] %v897
                %v899 = vld [vmem:[%s823 + $0x58] sm:$0xff]
                %900 = vst [vmem:[%s824 + $0x58] sm:$0xff] %v899
                %v901 = vld [vmem:[%s823 + $0x68] sm:$0xff]
                %902 = vst [vmem:[%s824 + $0x68] sm:$0xff] %v901
                %v903 = vld [vmem:[%s823 + $0x78] sm:$0xff]
                %904 = vst [vmem:[%s824 + $0x78] sm:$0xff] %v903
                %v905 = vld [vmem:[%s823 + $0x88] sm:$0xff]
                %906 = vst [vmem:[%s824 + $0x88] sm:$0xff] %v905
                %v907 = vld [vmem:[%s823 + $0x98] sm:$0xff]
                %908 = vst [vmem:[%s824 + $0x98] sm:$0xff] %v907
                %v909 = vld [vmem:[%s823 + $0xa8] sm:$0xff]
                %910 = vst [vmem:[%s824 + $0xa8] sm:$0xff] %v909
                %v911 = vld [vmem:[%s823 + $0xb8] sm:$0xff]
                %912 = vst [vmem:[%s824 + $0xb8] sm:$0xff] %v911
                %v913 = vld [vmem:[%s823 + $0xc8] sm:$0xff]
                %914 = vst [vmem:[%s824 + $0xc8] sm:$0xff] %v913
                %v915 = vld [vmem:[%s823 + $0xd8] sm:$0xff]
                %916 = vst [vmem:[%s824 + $0xd8] sm:$0xff] %v915
                %v917 = vld [vmem:[%s823 + $0xe8] sm:$0xff]
                %918 = vst [vmem:[%s824 + $0xe8] sm:$0xff] %v917
                %v919 = vld [vmem:[%s823 + $0xf8] sm:$0xff]
                %920 = vst [vmem:[%s824 + $0xf8] sm:$0xff] %v919
                %v921 = vld [vmem:[%s823 + $0x108] sm:$0xff]
                %922 = vst [vmem:[%s824 + $0x108] sm:$0xff] %v921
                %v923 = vld [vmem:[%s823 + $0x118] sm:$0xff]
                %924 = vst [vmem:[%s824 + $0x118] sm:$0xff] %v923
                %v925 = vld [vmem:[%s823 + $0x128] sm:$0xff]
                %926 = vst [vmem:[%s824 + $0x128] sm:$0xff] %v925
                %v927 = vld [vmem:[%s823 + $0x138] sm:$0xff]
                %928 = vst [vmem:[%s824 + $0x138] sm:$0xff] %v927
                %v929 = vld [vmem:[%s823 + $0x148] sm:$0xff]
                %930 = vst [vmem:[%s824 + $0x148] sm:$0xff] %v929
                %v931 = vld [vmem:[%s823 + $0x158] sm:$0xff]
                %932 = vst [vmem:[%s824 + $0x158] sm:$0xff] %v931
                %v933 = vld [vmem:[%s823 + $0x168] sm:$0xff]
                %934 = vst [vmem:[%s824 + $0x168] sm:$0xff] %v933
                %v935 = vld [vmem:[%s823 + $0x178] sm:$0xff]
                %936 = vst [vmem:[%s824 + $0x178] sm:$0xff] %v935
                %v937 = vld [vmem:[%s823 + $0x188] sm:$0xff]
                %938 = vst [vmem:[%s824 + $0x188] sm:$0xff] %v937
                %v939 = vld [vmem:[%s823 + $0x198] sm:$0xff]
                %940 = vst [vmem:[%s824 + $0x198] sm:$0xff] %v939
                %v941 = vld [vmem:[%s823 + $0x1a8] sm:$0xff]
                %942 = vst [vmem:[%s824 + $0x1a8] sm:$0xff] %v941
                %v943 = vld [vmem:[%s823 + $0x1b8] sm:$0xff]
                %944 = vst [vmem:[%s824 + $0x1b8] sm:$0xff] %v943
                %v945 = vld [vmem:[%s823 + $0x1c8] sm:$0xff]
                %946 = vst [vmem:[%s824 + $0x1c8] sm:$0xff] %v945
                %v947 = vld [vmem:[%s823 + $0x1d8] sm:$0xff]
                %948 = vst [vmem:[%s824 + $0x1d8] sm:$0xff] %v947
                %v949 = vld [vmem:[%s823 + $0x1e8] sm:$0xff]
                %950 = vst [vmem:[%s824 + $0x1e8] sm:$0xff] %v949
                %v951 = vld [vmem:[%s823 + $0x1f8] sm:$0xff]
                %952 = vst [vmem:[%s824 + $0x1f8] sm:$0xff] %v951
                %s953 = sadd.s32 1, %s822
                %p954 = scmp.ge.s32.totalorder %s953, %s815
                %s955 = scalar_select %p954, 0, %s953
                %s956 = smul.u32 %s955, 512
                %s957 = smul.u32 %s955, 512
                %s958 = scalar_lea.vmem %s796, %s956 [#allocation2]
                %s959 = scalar_lea.vmem %s809, %s957
              $region45: #{tpu_custom_call.1} parent=39 // loop_footer
                %s819 = sadd.s32 %s817, 1
              $region46: #{tpu_custom_call.1} parent=39 // loop_footer_branch
                %816 = sbr.rel target = $region42
              $region47: #{tpu_custom_call.1} parent=39 // loop_exit
                _
              %s960 = sshrl.u32 %s803, 5
              %s961 = sand.u32 %s803, 31
              %s962 = smul.u32 %s960, 32
              %s963 = smul.u32 16, %s962
              %s964 = scalar_lea.vmem %s796, %s963 [#allocation2]
              %s965 = smul.u32 16, %s962
              %s966 = scalar_lea.vmem %s809, %s965
              // While loop
              $region48: #{tpu_custom_call.1} parent=39 // loop_pre_header
                _
              $region49: #{tpu_custom_call.1} parent=39 // loop_header
                %s968 = sphi 0, %s970
                %p969 = scmp.ge.s32.totalorder %s968, %s961
                %s973 = sphi 0, %s982
                %s974 = sphi %s964, %s985
                %s975 = sphi %s966, %s986
              $region50: #{tpu_custom_call.1} parent=39 // loop_header_branch
                %972 = sbr.rel (%p969) target = $region54
              $region51: #{tpu_custom_call.1} parent=39 // loop_body
                %v976 = vld [vmem:[%s974] sm:$0xff]
                %977 = vst [vmem:[%s975] sm:$0xff] %v976
                %v978 = vld [vmem:[%s974 + $0x8] sm:$0xff]
                %979 = vst [vmem:[%s975 + $0x8] sm:$0xff] %v978
                %s980 = sadd.s32 1, %s973
                %p981 = scmp.ge.s32.totalorder %s980, %s961
                %s982 = scalar_select %p981, 0, %s980
                %s983 = smul.u32 %s982, 16
                %s984 = smul.u32 %s982, 16
                %s985 = scalar_lea.vmem %s964, %s983 [#allocation2]
                %s986 = scalar_lea.vmem %s966, %s984
              $region52: #{tpu_custom_call.1} parent=39 // loop_footer
                %s970 = sadd.s32 %s968, 1
              $region53: #{tpu_custom_call.1} parent=39 // loop_footer_branch
                %967 = sbr.rel target = $region49
              $region54: #{tpu_custom_call.1} parent=39 // loop_exit
                _
            $region40: #{tpu_custom_call.1} parent=35 // pred_fallthru
              _
            // Predicated region
            $region55: #{tpu_custom_call.1} parent=35 // pred_check
              _
            $region56: #{tpu_custom_call.1} parent=35 // pred_check_branch
              %988 = sbr.rel target = $region58
            $region57: #{tpu_custom_call.1} parent=35 // pred_region
              _
            $region58: #{tpu_custom_call.1} parent=35 // pred_fallthru
              _
          $region36: #{tpu_custom_call.1} parent=31 // pred_fallthru
            _
          %989 = vnop
        $region32: #{tpu_custom_call.1} parent=27 // pred_fallthru
          _
      $region28: #{tpu_custom_call.1} parent=5 // pred_fallthru
        _
      %p990 = scmp.le.s32.totalorder 2, %s8
      // Predicated region
      $region59: #{tpu_custom_call.1} parent=5 // pred_check
        %p991 = pneg %p990
      $region60: #{tpu_custom_call.1} parent=5 // pred_check_branch
        %993 = sbr.rel (%p991) target = $region62
      $region61: #{tpu_custom_call.1} parent=5 // pred_region
        %s994 = ssub.s32 %s8, 2
        // Predicated region
        $region63: #{tpu_custom_call.1} parent=61 // pred_check
          %p995 = pneg %p89
        $region64: #{tpu_custom_call.1} parent=61 // pred_check_branch
          %997 = sbr.rel (%p995) target = $region66
        $region65: #{tpu_custom_call.1} parent=61 // pred_region
          %s998 = sand.u32 %s74, 1
          %s999 = sand.u32 %s74, 1
          %s1000 = smul.addr %s999, 512
          %s1001 = scalar_lea.vmem [#allocation2], %s1000
        $region66: #{tpu_custom_call.1} parent=61 // pred_fallthru
          _
      $region62: #{tpu_custom_call.1} parent=5 // pred_fallthru
        _
    $region6: #{tpu_custom_call.1} parent=1 // loop_footer
      %s12 = sadd.s32 1, %s8
    $region7: #{tpu_custom_call.1} parent=1 // loop_footer_branch
      %7 = sbr.rel target = $region3
    $region8: #{tpu_custom_call.1} parent=1 // loop_exit
      _

</llo_original>
